<compile_context>
chip_gen: v6e
topology: v6e:2x2x1
jax: 0.10.0
libtpu: 0.0.40
codegen_flags: <defaults>
</compile_context>

<pallas_src>
import functools

import jax
import jax.numpy as jnp
import numpy as np
from jax import lax
from jax.experimental import pallas as pl
from jax.experimental.pallas import tpu as pltpu

EPS = 2.2204e-16
RAD2DEG = 57.29577951308232
_HALF_PI = 1.5707963267948966
_PI = 3.141592653589793


def _round_up(x, m):
    return ((x + m - 1) // m) * m


def _acos(x):
    """float32 arccos from mul/add/sqrt/select only (Cephes asin polynomial)."""
    ax = jnp.abs(x)
    small = ax <= 0.5
    t = jnp.sqrt(jnp.maximum(0.5 * (1.0 - ax), 0.0))    # used when |x| > 0.5
    u = jnp.where(small, ax, t)                          # poly argument in [0, 0.5]
    z = u * u
    p = 4.2163199048e-2
    p = p * z + 2.4181311049e-2
    p = p * z + 4.5470025998e-2
    p = p * z + 7.4953002686e-2
    p = p * z + 1.6666752422e-1
    s = u + u * z * p                                    # asin(u), u in [0, 0.5]
    asin_x = jnp.where(x < 0.0, -s, s)
    acos_small = _HALF_PI - asin_x                       # |x| <= 0.5
    acos_large = jnp.where(x < 0.0, _PI - 2.0 * s, 2.0 * s)   # |x| > 0.5
    return jnp.where(small, acos_small, acos_large)


def _sam_kernel(x1_ref, x2_ref, out_ref, *, cp, tr, half, n_real, n_valid, eps):
    """One (tr, 128) pixel-major block -> per-lane SAM-degree partial sums."""
    c = pl.program_id(0)
    i = pl.program_id(1)

    @pl.when(i == 0)
    def _init():
        out_ref[...] = jnp.zeros_like(out_ref)

    x1 = x1_ref[...].astype(jnp.float32)                 # (tr, 128) flat pixel-major
    x2 = x2_ref[...].astype(jnp.float32)

    mole = x1 * x2
    s1 = x1 * x1
    s2 = x2 * x2

    # Segmented sums over groups of `cp` consecutive lanes (= one pixel's
    # channels): log2(cp) roll+adds on the XLU.  After the loop, lane l with
    # l % cp == 0 holds the sum over lanes l .. l+cp-1.  cp | 128, so pixel
    # groups never straddle a 128-lane row.
    k = 1
    while k < cp:
        shift = 128 - k                                  # roll by -k (np.roll semantics)
        mole = mole + pltpu.roll(mole, shift=shift, axis=1)
        s1 = s1 + pltpu.roll(s1, shift=shift, axis=1)
        s2 = s2 + pltpu.roll(s2, shift=shift, axis=1)
        k *= 2

    eps32 = jnp.float32(eps)
    # (mole+eps) * rsqrt(s1*s2 + eps^2)  ~=  (mole+eps)/(sqrt(s1*s2)+eps),
    # and exact 0/0 still maps to ratio ~ 1 -> 0 degrees (reference behavior).
    ratio = (mole + eps32) * lax.rsqrt(s1 * s2 + eps32 * eps32)
    sam = _acos(jnp.clip(ratio, -1.0, 1.0)) * jnp.float32(RAD2DEG)

    lane = lax.broadcasted_iota(jnp.int32, (tr, 128), 1)
    group_start = (lane & (cp - 1)) == 0                 # one valid lane per pixel
    blk = c * half + i                                   # linear block id

    @pl.when(blk < n_real - 1)
    def _interior():                                     # every element is real data
        part = jnp.sum(jnp.where(group_start, sam, 0.0), axis=0, keepdims=True)
        out_ref[...] += part[None]

    @pl.when(blk >= n_real - 1)
    def _edge():                                         # last real block / duplicate
        row = lax.broadcasted_iota(jnp.int32, (tr, 128), 0)
        # NOTE: int32 flat index -> fine below ~2^31 elements (~500 Mpixel imgs).
        flat = (blk * tr + row) * 128 + lane
        mask = group_start & (flat < n_valid)
        part = jnp.sum(jnp.where(mask, sam, 0.0), axis=0, keepdims=True)
        out_ref[...] += part[None]


def loss_sam(im1, im2, *, eps=EPS, max_block_rows=4096):
    assert im1.shape == im2.shape and im1.ndim == 3
    H, W, C = im1.shape
    N = H * W
    assert C <= 128  # TODO(synk): hyperspectral C > 128 needs a channel-major path

    # ---- free, layout-preserving pixel-major view -------------------------
    cp = 1 << max(C - 1, 0).bit_length()                 # channels padded to pow2
    x1 = jnp.reshape(im1, (N, C))
    x2 = jnp.reshape(im2, (N, C))
    if cp != C:
        # Rare fallback (non power-of-two C): one extra HBM pass; zero channels
        # do not change mole / s1 / s2.
        x1 = jnp.pad(x1, ((0, 0), (0, cp - C)))
        x2 = jnp.pad(x2, ((0, 0), (0, cp - C)))
    n_valid = N * cp                                      # real flat elements
    n_elems = _round_up(n_valid, 128)
    x1 = jnp.reshape(x1, (-1,))
    x2 = jnp.reshape(x2, (-1,))
    if n_elems != n_valid:
        # Rare fallback (128 does not divide N*cp): one extra HBM pass.
        x1 = jnp.pad(x1, (0, n_elems - n_valid))
        x2 = jnp.pad(x2, (0, n_elems - n_valid))
    rows = n_elems // 128
    x1 = jnp.reshape(x1, (rows, 128))                     # pure bitcast view
    x2 = jnp.reshape(x2, (rows, 128))

    # ---- block sizing ------------------------------------------------------
    if rows <= 8:
        tr = rows                                         # single full-extent block
    else:
        # Aim for ~8 real blocks (>= 4 per TC), capped at 2 MiB/input/buffer.
        tr = min(max_block_rows, _round_up(pl.cdiv(rows, 8), 8))
    n_real = pl.cdiv(rows, tr)                            # blocks holding real data
    n_split = 2 if n_real >= 2 else 1                     # feed both v7x TensorCores
    half = pl.cdiv(n_real, n_split)

    def in_map(c, i):
        # Clamp so the (fully masked) duplicate block never maps out of bounds.
        return (jnp.minimum(c * half + i, n_real - 1), 0)

    kernel = functools.partial(
        _sam_kernel, cp=cp, tr=tr, half=half, n_real=n_real, n_valid=n_valid, eps=eps
    )

    partials = pl.pallas_call(
        kernel,
        out_shape=jax.ShapeDtypeStruct((n_split, 1, 128), jnp.float32),
        grid=(n_split, half),
        in_specs=[
            pl.BlockSpec((tr, 128), in_map),
            pl.BlockSpec((tr, 128), in_map),
        ],
        out_specs=pl.BlockSpec((1, 1, 128), lambda c, i: (c, 0, 0)),
        compiler_params=pltpu.CompilerParams(
            dimension_semantics=("parallel", "arbitrary"),
            vmem_limit_bytes=32 * 1024 * 1024,
        ),
    )(x1, x2)

    # Tiny epilogue: sum <= 256 per-lane partials, take the mean over pixels.
    return jnp.sum(partials) / jnp.float32(N)


def _numpy_reference(im1, im2, eps=EPS):
    H, W, C = im1.shape
    a = np.reshape(np.asarray(im1, dtype=np.float64), (H * W, C))
    b = np.reshape(np.asarray(im2, dtype=np.float64), (H * W, C))
    mole = np.sum(a * b, axis=1)
    deno = np.sqrt(np.sum(a * a, axis=1)) * np.sqrt(np.sum(b * b, axis=1))
    sam = np.rad2deg(np.arccos(((mole + eps) / (deno + eps)).clip(-1, 1)))
    return np.mean(sam)


if __name__ == "__main__":
    key = jax.random.PRNGKey(0)
    loss_fn = jax.jit(loss_sam)
    # (32,32,4): multi-block, 2-way split; (16,16,4): single block;
    # (17,9,3): non-pow2 C + non-128-divisible flat length (padding fallback).
    for (H, W, C) in [(32, 32, 4), (16, 16, 4), (17, 9, 3)]:
        key, k1, k2 = jax.random.split(key, 3)
        im1 = jax.random.normal(k1, (H, W, C), dtype=jnp.float32)
        im2 = jax.random.normal(k2, (H, W, C), dtype=jnp.float32)
        out = jax.block_until_ready(loss_fn(im1, im2))
        ref = _numpy_reference(im1, im2)
        np.testing.assert_allclose(np.asarray(out), ref, rtol=5e-4, atol=5e-3)
    print("KERNEL_OK")
</pallas_src>

<mosaic_0001>
module attributes {stable_mosaic.version = 11 : i64} {
  func.func @_sam_kernel(%arg0: i32, %arg1: i32, %arg2: memref<8x128xf32, #tpu.memory_space<vmem>>, %arg3: memref<8x128xf32, #tpu.memory_space<vmem>>, %arg4: memref<1x1x128xf32, #tpu.memory_space<vmem>>) attributes {dimension_semantics = [#tpu.dimension_semantics<parallel>, #tpu.dimension_semantics<arbitrary>], iteration_bounds = array<i64: 2, 2>, scalar_prefetch = 0 : i64, scratch_operands = 0 : i64, tpu.core_type = #tpu.core_type<tc>, window_params = [{transform_indices = @transform_0, window_bounds = array<i64: 8, 128>}, {transform_indices = @transform_1, window_bounds = array<i64: 8, 128>}, {transform_indices = @transform_2, window_bounds = array<i64: 1, 1, 128>}]} {
    %c0_i32 = arith.constant 0 : i32
    %0 = arith.cmpi eq, %arg1, %c0_i32 : i32
    %1 = arith.extui %0 : i1 to i32
    %c0_i32_0 = arith.constant 0 : i32
    %2 = arith.cmpi ne, %1, %c0_i32_0 : i32
    scf.if %2 {
      %cst_34 = arith.constant 0.000000e+00 : f32
      %92 = vector.broadcast %cst_34 : f32 to vector<1x1x128xf32>
      %c0_35 = arith.constant 0 : index
      %c0_36 = arith.constant 0 : index
      %c0_37 = arith.constant 0 : index
      %93 = vector.load %arg4[%c0_35, %c0_36, %c0_37] : memref<1x1x128xf32, #tpu.memory_space<vmem>>, vector<1x1x128xf32>
      tpu.vector_store %arg4[%c0_35, %c0_36, %c0_37], %92 {strides = array<i32>} : memref<1x1x128xf32, #tpu.memory_space<vmem>>, vector<1x1x128xf32>,
    } else {
    }
    %c0 = arith.constant 0 : index
    %c0_1 = arith.constant 0 : index
    %3 = vector.load %arg2[%c0, %c0_1] : memref<8x128xf32, #tpu.memory_space<vmem>>, vector<8x128xf32>
    %c0_2 = arith.constant 0 : index
    %c0_3 = arith.constant 0 : index
    %4 = vector.load %arg3[%c0_2, %c0_3] : memref<8x128xf32, #tpu.memory_space<vmem>>, vector<8x128xf32>
    %5 = arith.mulf %3, %4 : vector<8x128xf32>
    %6 = arith.mulf %3, %3 : vector<8x128xf32>
    %7 = arith.mulf %4, %4 : vector<8x128xf32>
    %c127_i32 = arith.constant 127 : i32
    %8 = tpu.dynamic_rotate %5 by %c127_i32 dim 1 : vector<8x128xf32>, i32 -> vector<8x128xf32>
    %9 = arith.addf %5, %8 : vector<8x128xf32>
    %c127_i32_4 = arith.constant 127 : i32
    %10 = tpu.dynamic_rotate %6 by %c127_i32_4 dim 1 : vector<8x128xf32>, i32 -> vector<8x128xf32>
    %11 = arith.addf %6, %10 : vector<8x128xf32>
    %c127_i32_5 = arith.constant 127 : i32
    %12 = tpu.dynamic_rotate %7 by %c127_i32_5 dim 1 : vector<8x128xf32>, i32 -> vector<8x128xf32>
    %13 = arith.addf %7, %12 : vector<8x128xf32>
    %c126_i32 = arith.constant 126 : i32
    %14 = tpu.dynamic_rotate %9 by %c126_i32 dim 1 : vector<8x128xf32>, i32 -> vector<8x128xf32>
    %15 = arith.addf %9, %14 : vector<8x128xf32>
    %c126_i32_6 = arith.constant 126 : i32
    %16 = tpu.dynamic_rotate %11 by %c126_i32_6 dim 1 : vector<8x128xf32>, i32 -> vector<8x128xf32>
    %17 = arith.addf %11, %16 : vector<8x128xf32>
    %c126_i32_7 = arith.constant 126 : i32
    %18 = tpu.dynamic_rotate %13 by %c126_i32_7 dim 1 : vector<8x128xf32>, i32 -> vector<8x128xf32>
    %19 = arith.addf %13, %18 : vector<8x128xf32>
    %cst = arith.constant 2.220400e-16 : f32
    %20 = vector.broadcast %cst : f32 to vector<8x128xf32>
    %21 = arith.addf %15, %20 : vector<8x128xf32>
    %22 = arith.mulf %17, %19 : vector<8x128xf32>
    %cst_8 = arith.constant 2.220400e-16 : f32
    %cst_9 = arith.constant 2.220400e-16 : f32
    %23 = arith.mulf %cst_8, %cst_9 : f32
    %24 = vector.broadcast %23 : f32 to vector<8x128xf32>
    %25 = arith.addf %22, %24 : vector<8x128xf32>
    %26 = math.rsqrt %25 : vector<8x128xf32>
    %27 = arith.mulf %21, %26 : vector<8x128xf32>
    %cst_10 = arith.constant -1.000000e+00 : f32
    %cst_11 = arith.constant 1.000000e+00 : f32
    %28 = vector.broadcast %cst_10 : f32 to vector<8x128xf32>
    %29 = arith.maximumf %28, %27 : vector<8x128xf32>
    %30 = vector.broadcast %cst_11 : f32 to vector<8x128xf32>
    %31 = arith.minimumf %30, %29 : vector<8x128xf32>
    %32 = math.absf %31 : vector<8x128xf32>
    %cst_12 = arith.constant 5.000000e-01 : f32
    %33 = vector.broadcast %cst_12 : f32 to vector<8x128xf32>
    %34 = arith.cmpf ole, %32, %33 : vector<8x128xf32>
    %cst_13 = arith.constant 1.000000e+00 : f32
    %35 = vector.broadcast %cst_13 : f32 to vector<8x128xf32>
    %36 = arith.subf %35, %32 : vector<8x128xf32>
    %cst_14 = arith.constant 5.000000e-01 : f32
    %37 = vector.broadcast %cst_14 : f32 to vector<8x128xf32>
    %38 = arith.mulf %37, %36 : vector<8x128xf32>
    %cst_15 = arith.constant 0.000000e+00 : f32
    %39 = vector.broadcast %cst_15 : f32 to vector<8x128xf32>
    %40 = arith.maximumf %38, %39 : vector<8x128xf32>
    %41 = math.sqrt %40 : vector<8x128xf32>
    %42 = arith.select %34, %32, %41 : vector<8x128xi1>, vector<8x128xf32>
    %43 = arith.mulf %42, %42 : vector<8x128xf32>
    %cst_16 = arith.constant 4.216320e-02 : f32
    %44 = vector.broadcast %cst_16 : f32 to vector<8x128xf32>
    %45 = arith.mulf %44, %43 : vector<8x128xf32>
    %cst_17 = arith.constant 0.024181312 : f32
    %46 = vector.broadcast %cst_17 : f32 to vector<8x128xf32>
    %47 = arith.addf %45, %46 : vector<8x128xf32>
    %48 = arith.mulf %47, %43 : vector<8x128xf32>
    %cst_18 = arith.constant 0.0454700254 : f32
    %49 = vector.broadcast %cst_18 : f32 to vector<8x128xf32>
    %50 = arith.addf %48, %49 : vector<8x128xf32>
    %51 = arith.mulf %50, %43 : vector<8x128xf32>
    %cst_19 = arith.constant 0.0749530047 : f32
    %52 = vector.broadcast %cst_19 : f32 to vector<8x128xf32>
    %53 = arith.addf %51, %52 : vector<8x128xf32>
    %54 = arith.mulf %53, %43 : vector<8x128xf32>
    %cst_20 = arith.constant 0.166667521 : f32
    %55 = vector.broadcast %cst_20 : f32 to vector<8x128xf32>
    %56 = arith.addf %54, %55 : vector<8x128xf32>
    %57 = arith.mulf %42, %43 : vector<8x128xf32>
    %58 = arith.mulf %57, %56 : vector<8x128xf32>
    %59 = arith.addf %42, %58 : vector<8x128xf32>
    %cst_21 = arith.constant 0.000000e+00 : f32
    %60 = vector.broadcast %cst_21 : f32 to vector<8x128xf32>
    %61 = arith.cmpf olt, %31, %60 : vector<8x128xf32>
    %cst_22 = arith.constant 0.000000e+00 : f32
    %62 = vector.broadcast %cst_22 : f32 to vector<8x128xf32>
    %63 = arith.subf %62, %59 : vector<8x128xf32>
    %64 = arith.select %61, %63, %59 : vector<8x128xi1>, vector<8x128xf32>
    %cst_23 = arith.constant 1.57079637 : f32
    %65 = vector.broadcast %cst_23 : f32 to vector<8x128xf32>
    %66 = arith.subf %65, %64 : vector<8x128xf32>
    %cst_24 = arith.constant 0.000000e+00 : f32
    %67 = vector.broadcast %cst_24 : f32 to vector<8x128xf32>
    %68 = arith.cmpf olt, %31, %67 : vector<8x128xf32>
    %cst_25 = arith.constant 2.000000e+00 : f32
    %69 = vector.broadcast %cst_25 : f32 to vector<8x128xf32>
    %70 = arith.mulf %69, %59 : vector<8x128xf32>
    %cst_26 = arith.constant 3.14159274 : f32
    %71 = vector.broadcast %cst_26 : f32 to vector<8x128xf32>
    %72 = arith.subf %71, %70 : vector<8x128xf32>
    %cst_27 = arith.constant 2.000000e+00 : f32
    %73 = vector.broadcast %cst_27 : f32 to vector<8x128xf32>
    %74 = arith.mulf %73, %59 : vector<8x128xf32>
    %75 = arith.select %68, %72, %74 : vector<8x128xi1>, vector<8x128xf32>
    %76 = arith.select %34, %66, %75 : vector<8x128xi1>, vector<8x128xf32>
    %cst_28 = arith.constant 57.2957802 : f32
    %77 = vector.broadcast %cst_28 : f32 to vector<8x128xf32>
    %78 = arith.mulf %76, %77 : vector<8x128xf32>
    %79 = tpu.iota {dimensions = array<i32: 1>} : vector<8x128xi32>
    %c3_i32 = arith.constant 3 : i32
    %80 = vector.broadcast %c3_i32 : i32 to vector<8x128xi32>
    %81 = arith.andi %79, %80 : vector<8x128xi32>
    %c0_i32_29 = arith.constant 0 : i32
    %82 = vector.broadcast %c0_i32_29 : i32 to vector<8x128xi32>
    %83 = arith.cmpi eq, %81, %82 : vector<8x128xi32>
    %c2_i32 = arith.constant 2 : i32
    %84 = arith.muli %arg0, %c2_i32 : i32
    %85 = arith.addi %84, %arg1 : i32
    %c3_i32_30 = arith.constant 3 : i32
    %86 = arith.cmpi slt, %85, %c3_i32_30 : i32
    %87 = arith.extui %86 : i1 to i32
    %c0_i32_31 = arith.constant 0 : i32
    %88 = arith.cmpi ne, %87, %c0_i32_31 : i32
    scf.if %88 {
      %cst_34 = arith.constant 0.000000e+00 : f32
      %92 = vector.broadcast %cst_34 : f32 to vector<8x128xf32>
      %93 = arith.select %83, %78, %92 : vector<8x128xi1>, vector<8x128xf32>
      %cst_35 = arith.constant dense<0.000000e+00> : vector<128xf32>
      %94 = vector.multi_reduction <add>, %93, %cst_35 [0] : vector<8x128xf32> to vector<128xf32>
      %95 = vector.shape_cast %94 : vector<128xf32> to vector<1x128xf32>
      %c0_36 = arith.constant 0 : index
      %c0_37 = arith.constant 0 : index
      %c0_38 = arith.constant 0 : index
      %96 = vector.load %arg4[%c0_36, %c0_37, %c0_38] : memref<1x1x128xf32, #tpu.memory_space<vmem>>, vector<1x1x128xf32>
      %97 = vector.shape_cast %95 : vector<1x128xf32> to vector<1x1x128xf32>
      %98 = arith.addf %96, %97 : vector<1x1x128xf32>
      %c0_39 = arith.constant 0 : index
      %c0_40 = arith.constant 0 : index
      %c0_41 = arith.constant 0 : index
      %99 = vector.load %arg4[%c0_39, %c0_40, %c0_41] : memref<1x1x128xf32, #tpu.memory_space<vmem>>, vector<1x1x128xf32>
      tpu.vector_store %arg4[%c0_39, %c0_40, %c0_41], %98 {strides = array<i32>} : memref<1x1x128xf32, #tpu.memory_space<vmem>>, vector<1x1x128xf32>,
    } else {
    }
    %c3_i32_32 = arith.constant 3 : i32
    %89 = arith.cmpi sge, %85, %c3_i32_32 : i32
    %90 = arith.extui %89 : i1 to i32
    %c0_i32_33 = arith.constant 0 : i32
    %91 = arith.cmpi ne, %90, %c0_i32_33 : i32
    scf.if %91 {
      %92 = tpu.iota {dimensions = array<i32: 0>} : vector<8x128xi32>
      %c8_i32 = arith.constant 8 : i32
      %93 = arith.muli %85, %c8_i32 : i32
      %94 = vector.broadcast %93 : i32 to vector<8x128xi32>
      %95 = arith.addi %94, %92 : vector<8x128xi32>
      %c128_i32 = arith.constant 128 : i32
      %96 = vector.broadcast %c128_i32 : i32 to vector<8x128xi32>
      %97 = arith.muli %95, %96 : vector<8x128xi32>
      %98 = arith.addi %97, %79 : vector<8x128xi32>
      %c4096_i32 = arith.constant 4096 : i32
      %99 = vector.broadcast %c4096_i32 : i32 to vector<8x128xi32>
      %100 = arith.cmpi slt, %98, %99 : vector<8x128xi32>
      %101 = arith.andi %83, %100 : vector<8x128xi1>
      %cst_34 = arith.constant 0.000000e+00 : f32
      %102 = vector.broadcast %cst_34 : f32 to vector<8x128xf32>
      %103 = arith.select %101, %78, %102 : vector<8x128xi1>, vector<8x128xf32>
      %cst_35 = arith.constant dense<0.000000e+00> : vector<128xf32>
      %104 = vector.multi_reduction <add>, %103, %cst_35 [0] : vector<8x128xf32> to vector<128xf32>
      %105 = vector.shape_cast %104 : vector<128xf32> to vector<1x128xf32>
      %c0_36 = arith.constant 0 : index
      %c0_37 = arith.constant 0 : index
      %c0_38 = arith.constant 0 : index
      %106 = vector.load %arg4[%c0_36, %c0_37, %c0_38] : memref<1x1x128xf32, #tpu.memory_space<vmem>>, vector<1x1x128xf32>
      %107 = vector.shape_cast %105 : vector<1x128xf32> to vector<1x1x128xf32>
      %108 = arith.addf %106, %107 : vector<1x1x128xf32>
      %c0_39 = arith.constant 0 : index
      %c0_40 = arith.constant 0 : index
      %c0_41 = arith.constant 0 : index
      %109 = vector.load %arg4[%c0_39, %c0_40, %c0_41] : memref<1x1x128xf32, #tpu.memory_space<vmem>>, vector<1x1x128xf32>
      tpu.vector_store %arg4[%c0_39, %c0_40, %c0_41], %108 {strides = array<i32>} : memref<1x1x128xf32, #tpu.memory_space<vmem>>, vector<1x1x128xf32>,
    } else {
    }
    return
  }
  func.func @transform_0(%arg0: i32, %arg1: i32) -> (i32, i32) {
    %c2_i32 = arith.constant 2 : i32
    %0 = arith.muli %arg0, %c2_i32 : i32
    %1 = arith.addi %0, %arg1 : i32
    %c3_i32 = arith.constant 3 : i32
    %2 = arith.minsi %1, %c3_i32 : i32
    %c0_i32 = arith.constant 0 : i32
    %c0_i32_0 = arith.constant 0 : i32
    return %2, %c0_i32 : i32, i32
  }
  func.func @transform_1(%arg0: i32, %arg1: i32) -> (i32, i32) {
    %c2_i32 = arith.constant 2 : i32
    %0 = arith.muli %arg0, %c2_i32 : i32
    %1 = arith.addi %0, %arg1 : i32
    %c3_i32 = arith.constant 3 : i32
    %2 = arith.minsi %1, %c3_i32 : i32
    %c0_i32 = arith.constant 0 : i32
    %c0_i32_0 = arith.constant 0 : i32
    return %2, %c0_i32 : i32, i32
  }
  func.func @transform_2(%arg0: i32, %arg1: i32) -> (i32, i32, i32) {
    %c0_i32 = arith.constant 0 : i32
    %c0_i32_0 = arith.constant 0 : i32
    %c0_i32_1 = arith.constant 0 : i32
    return %arg0, %c0_i32, %c0_i32_0 : i32, i32, i32
  }
}

</mosaic_0001>

<llo_original>
// kernel: loss_sam.1
$region0: #{loss_sam.1}
  #allocation0 [shape = 'u32[]', space=smem, size = 0x4, offset = 0x4, fixed_abs, tag = 'smem constant byte address 0x4 - core index']
  #allocation1 [shape = 'u32[144,128]{1,0:T(1,128)}', space=vmem, size = 0x12000, scoped, tag = 'internal scratch']
  %s0 = inlined_call_operand.vmem [shape: f32[32,128], index: 0, kind: input, shape index: {}]
  %s1 = inlined_call_operand.vmem [shape: f32[32,128], index: 1, kind: input, shape index: {}]
  %s2 = inlined_call_operand.vmem [shape: f32[2,1,128], index: 2, kind: output, shape index: {}]
  %s3 = sld [smem:[#allocation0]]
  $region53: #{loss_sam.1} parent=0
    _
  %s5 = ssub.s32 1, %s3
  %s6 = scalar_select 0, %s5, %s3
  loop: start=0, step=1, limit=6
  $region2: #{loss_sam.1} parent=0 // loop_pre_header
    _
  $region3: #{loss_sam.1} parent=0 // loop_header
    %s8 = sphi 0, %s12
    %p9 = scmp.ge.s32.totalorder %s8, 6
    %s15 = sphi 0, %s27
    %s16 = sphi 0, %s23
    %s17 = sphi 0, %s15
    %s18 = sphi 0, %s16
    %s19 = sphi 0, %s17
    %s20 = sphi 0, %s18
    %s38 = sphi 0, %s40
    %s41 = sphi 0, %s38
    %s42 = sphi 0, %s41
    %s58 = sphi 0, %s42
    %s72 = sphi 0, %s74
    %s75 = sphi 0, %s72
    %s76 = sphi 0, %s75
    %s92 = sphi 0, %s76
    %s98 = sphi 0, %s100
    %s101 = sphi 0, %s98
    %s102 = sphi 0, %s101
    %s118 = sphi 0, %s102
  $region4: #{loss_sam.1} parent=0 // loop_header_branch
    %11 = sbr.rel (%p9) target = $region8
  $region5: #{loss_sam.1} parent=0 // loop_body
    %s13 = ssub.s32 %s8, 1
    %s14 = ssub.s32 %s8, 2
    %s21 = sadd.s32 1, %s16
    %p22 = scmp.ge.s32.totalorder %s21, 2
    %s23 = scalar_select %p22, 0, %s21
    %s24 = sadd.s32 1, %s15
    %s25 = scalar_select %p22, %s24, %s15
    %p26 = scmp.ge.s32.totalorder %s25, 2
    %s27 = scalar_select %p26, 0, %s25
    %s28 = smul.u32 %s15, 2
    %s29 = sadd.s32 %s28, %s16
    %p30 = scmp.lt.s32.totalorder %s29, 3
    %s31 = scalar_select %p30, %s29, 3
    %s32 = smul.u32 %s27, 2
    %s33 = sadd.s32 %s32, %s23
    %p34 = scmp.lt.s32.totalorder %s33, 3
    %s35 = scalar_select %p34, %s33, 3
    %s36 = ssub.s32 %s31, %s35
    %p37 = scmp.eq.s32.totalorder %s36, 0
    %s39 = sadd.s32 %s38, 1
    %s40 = scalar_select %p37, %s38, %s39
    %p43 = pneg %p37
    %p44 = scmp.eq.s32.totalorder %s8, 3
    %p45 = por %p43, %p44
    %p46 = scmp.ne.s32.totalorder %s38, %s41
    %p47 = scmp.eq.s32.totalorder %s8, 0
    %p48 = por %p46, %p47
    %p49 = scmp.ne.s32.totalorder %s38, %s41
    %p50 = scmp.eq.s32.totalorder %s13, 3
    %p51 = por %p49, %p50
    %p52 = scmp.ne.s32.totalorder %s41, %s42
    %p53 = scmp.eq.s32.totalorder %s13, 0
    %p54 = por %p52, %p53
    %p55 = scmp.ne.s32.totalorder %s41, %s42
    %p56 = scmp.eq.s32.totalorder %s14, 3
    %p57 = por %p55, %p56
    %p59 = scmp.ne.s32.totalorder %s42, %s58
    %p60 = scmp.eq.s32.totalorder %s14, 0
    %p61 = por %p59, %p60
    %s62 = smul.u32 %s15, 2
    %s63 = sadd.s32 %s62, %s16
    %p64 = scmp.lt.s32.totalorder %s63, 3
    %s65 = scalar_select %p64, %s63, 3
    %s66 = smul.u32 %s27, 2
    %s67 = sadd.s32 %s66, %s23
    %p68 = scmp.lt.s32.totalorder %s67, 3
    %s69 = scalar_select %p68, %s67, 3
    %s70 = ssub.s32 %s65, %s69
    %p71 = scmp.eq.s32.totalorder %s70, 0
    %s73 = sadd.s32 %s72, 1
    %s74 = scalar_select %p71, %s72, %s73
    %p77 = pneg %p71
    %p78 = scmp.eq.s32.totalorder %s8, 3
    %p79 = por %p77, %p78
    %p80 = scmp.ne.s32.totalorder %s72, %s75
    %p81 = scmp.eq.s32.totalorder %s8, 0
    %p82 = por %p80, %p81
    %p83 = scmp.ne.s32.totalorder %s72, %s75
    %p84 = scmp.eq.s32.totalorder %s13, 3
    %p85 = por %p83, %p84
    %p86 = scmp.ne.s32.totalorder %s75, %s76
    %p87 = scmp.eq.s32.totalorder %s13, 0
    %p88 = por %p86, %p87
    %p89 = scmp.ne.s32.totalorder %s75, %s76
    %p90 = scmp.eq.s32.totalorder %s14, 3
    %p91 = por %p89, %p90
    %p93 = scmp.ne.s32.totalorder %s76, %s92
    %p94 = scmp.eq.s32.totalorder %s14, 0
    %p95 = por %p93, %p94
    %s96 = ssub.s32 %s15, %s27
    %p97 = scmp.eq.s32.totalorder %s96, 0
    %s99 = sadd.s32 %s98, 1
    %s100 = scalar_select %p97, %s98, %s99
    %p103 = pneg %p97
    %p104 = scmp.eq.s32.totalorder %s8, 3
    %p105 = por %p103, %p104
    %p106 = scmp.ne.s32.totalorder %s98, %s101
    %p107 = scmp.eq.s32.totalorder %s8, 0
    %p108 = por %p106, %p107
    %p109 = scmp.ne.s32.totalorder %s98, %s101
    %p110 = scmp.eq.s32.totalorder %s13, 3
    %p111 = por %p109, %p110
    %p112 = scmp.ne.s32.totalorder %s101, %s102
    %p113 = scmp.eq.s32.totalorder %s13, 0
    %p114 = por %p112, %p113
    %p115 = scmp.ne.s32.totalorder %s101, %s102
    %p116 = scmp.eq.s32.totalorder %s14, 3
    %p117 = por %p115, %p116
    %p119 = scmp.ne.s32.totalorder %s102, %s118
    %p120 = scmp.eq.s32.totalorder %s14, 0
    %p121 = por %p119, %p120
    %p122 = scmp.le.s32.totalorder 1, %s8
    %p123 = scmp.lt.s32.totalorder %s8, 5
    %p124 = pnand %p122, %p123
    %p125 = pneg %p124
    // Predicated region
    $region9: #{loss_sam.1} parent=5 // pred_check
      _
    $region10: #{loss_sam.1} parent=5 // pred_check_branch
      %127 = sbr.rel (%p124) target = $region12
    $region11: #{loss_sam.1} parent=5 // pred_region
      %s128 = ssub.s32 %s8, 1
    $region12: #{loss_sam.1} parent=5 // pred_fallthru
      _
    %p129 = scmp.lt.s32.totalorder %s8, 4
    // Predicated region
    $region13: #{loss_sam.1} parent=5 // pred_check
      %p130 = pneg %p129
    $region14: #{loss_sam.1} parent=5 // pred_check_branch
      %132 = sbr.rel (%p130) target = $region16
    $region15: #{loss_sam.1} parent=5 // pred_region
      // Predicated region
      $region17: #{loss_sam.1} parent=15 // pred_check
        %p133 = pneg %p48
      $region18: #{loss_sam.1} parent=15 // pred_check_branch
        %135 = sbr.rel (%p133) target = $region20
      $region19: #{loss_sam.1} parent=15 // pred_region
        %s136 = smul.u32 %s15, 2
        %s137 = sadd.s32 %s136, %s16
        %p138 = scmp.lt.s32.totalorder %s137, 3
        %s139 = scalar_select %p138, %s137, 3
        %p140 = scmp.lt.s32.totalorder %s139, 3
        %s141 = scalar_select %p140, %s139, 3
        %s142 = smul.addr %s141, 8
        %s143 = scalar_lea.vmem %s0, %s142
        %s144 = smul.u32 %s15, 2
        %s145 = sadd.s32 %s144, %s16
        %p146 = scmp.lt.s32.totalorder %s145, 3
        %s147 = scalar_select %p146, %s145, 3
      $region20: #{loss_sam.1} parent=15 // pred_fallthru
        _
      // Predicated region
      $region21: #{loss_sam.1} parent=15 // pred_check
        %p148 = pneg %p82
      $region22: #{loss_sam.1} parent=15 // pred_check_branch
        %150 = sbr.rel (%p148) target = $region24
      $region23: #{loss_sam.1} parent=15 // pred_region
        %s151 = smul.u32 %s15, 2
        %s152 = sadd.s32 %s151, %s16
        %p153 = scmp.lt.s32.totalorder %s152, 3
        %s154 = scalar_select %p153, %s152, 3
        %p155 = scmp.lt.s32.totalorder %s154, 3
        %s156 = scalar_select %p155, %s154, 3
        %s157 = smul.addr %s156, 8
        %s158 = scalar_lea.vmem %s1, %s157
        %s159 = smul.u32 %s15, 2
        %s160 = sadd.s32 %s159, %s16
        %p161 = scmp.lt.s32.totalorder %s160, 3
        %s162 = scalar_select %p161, %s160, 3
      $region24: #{loss_sam.1} parent=15 // pred_fallthru
        _
    $region16: #{loss_sam.1} parent=5 // pred_fallthru
      _
    %p163 = scmp.le.s32.totalorder 1, %s8
    %p164 = scmp.lt.s32.totalorder %s8, 5
    %p165 = pnand %p163, %p164
    %p166 = pneg %p165
    // Predicated region
    $region25: #{loss_sam.1} parent=5 // pred_check
      _
    $region26: #{loss_sam.1} parent=5 // pred_check_branch
      %168 = sbr.rel (%p165) target = $region28
    $region27: #{loss_sam.1} parent=5 // pred_region
      %s169 = ssub.s32 %s8, 1
      %s170 = smul.u32 %s17, 2
      %s171 = sadd.s32 %s170, %s18
      %p172 = scmp.lt.s32.totalorder %s171, 3
      %s173 = scalar_select %p172, %s171, 3
      %p174 = scmp.lt.s32.totalorder %s173, 3
      %s175 = scalar_select %p174, %s173, 3
      %s176 = smul.addr %s175, 8
      %s177 = scalar_lea.vmem %s0, %s176
      %p178 = pneg %p54
      %p179 = pneg %p51
      %s180 = smul.u32 %s17, 2
      %s181 = sadd.s32 %s180, %s18
      %p182 = scmp.lt.s32.totalorder %s181, 3
      %s183 = scalar_select %p182, %s181, 3
      %p184 = scmp.lt.s32.totalorder %s183, 3
      %s185 = scalar_select %p184, %s183, 3
      %s186 = smul.addr %s185, 8
      %s187 = scalar_lea.vmem %s1, %s186
      %p188 = pneg %p88
      %p189 = pneg %p85
      %p190 = pneg %p114
      %p191 = pneg %p111
      %p192 = scmp.lt.s32.totalorder %s17, 1
      %s193 = scalar_select %p192, %s17, 1
      %s194 = scalar_lea.vmem %s2, %s193
      %s195 = smul.u32 %s17, 2
      %s196 = sadd.s32 %s195, %s18
      %p197 = scmp.lt.s32.totalorder %s196, 3
      %s198 = scalar_select %p197, %s196, 3
      %p199 = scmp.lt.s32.totalorder %s198, 3
      %s200 = scalar_select %p199, %s198, 3
      %s201 = smul.addr %s200, 8
      %s202 = scalar_lea.vmem %s0, %s201
      %s203 = smul.u32 %s17, 2
      %s204 = sadd.s32 %s203, %s18
      %p205 = scmp.lt.s32.totalorder %s204, 3
      %s206 = scalar_select %p205, %s204, 3
      %s207 = smul.u32 %s17, 2
      %s208 = sadd.s32 %s207, %s18
      %p209 = scmp.lt.s32.totalorder %s208, 3
      %s210 = scalar_select %p209, %s208, 3
      %p211 = scmp.lt.s32.totalorder %s210, 3
      %s212 = scalar_select %p211, %s210, 3
      %s213 = smul.addr %s212, 8
      %s214 = scalar_lea.vmem %s1, %s213
      %s215 = smul.u32 %s17, 2
      %s216 = sadd.s32 %s215, %s18
      %p217 = scmp.lt.s32.totalorder %s216, 3
      %s218 = scalar_select %p217, %s216, 3
      %p219 = scmp.lt.s32.totalorder %s17, 1
      %s220 = scalar_select %p219, %s17, 1
      %s221 = scalar_lea.vmem %s2, %s220
      %p222 = scmp.eq.s32.totalorder %s18, 0
      // Predicated region
      $region29: #{loss_sam.1} parent=27 // pred_check
        %p223 = pneg %p222
      $region30: #{loss_sam.1} parent=27 // pred_check_branch
        %225 = sbr.rel (%p223) target = $region32
      $region31: #{loss_sam.1} parent=27 // pred_region
        %226 = vst [vmem:[%s221] sm:$0x1] 0.0
      $region32: #{loss_sam.1} parent=27 // pred_fallthru
        _
      %v227 = vld [vmem:[%s202] sm:$0xff]
      %v228 = vld [vmem:[%s214] sm:$0xff]
      %v229 = vmul.f32 %v227, %v228
      %v230 = vmul.f32 %v227, %v227
      %v231 = vmul.f32 %v228, %v228
      %232 = vrot.lane.b32.xlu0 %v229, 127
      %v233 = vpop.permute.xlu0 %232
      %v234 = vadd.f32 %v229, %v233
      %235 = vrot.lane.b32.xlu0 %v230, 127
      %v236 = vpop.permute.xlu0 %235
      %v237 = vadd.f32 %v230, %v236
      %238 = vrot.lane.b32.xlu0 %v231, 127
      %v239 = vpop.permute.xlu0 %238
      %v240 = vadd.f32 %v231, %v239
      %241 = vrot.lane.b32.xlu0 %v234, 126
      %v242 = vpop.permute.xlu0 %241
      %v243 = vadd.f32 %v234, %v242
      %244 = vrot.lane.b32.xlu0 %v237, 126
      %v245 = vpop.permute.xlu0 %244
      %v246 = vadd.f32 %v237, %v245
      %247 = vrot.lane.b32.xlu0 %v240, 126
      %v248 = vpop.permute.xlu0 %247
      %v249 = vadd.f32 %v240, %v248
      %v250 = vadd.f32 %v243, 2.2204e-16
      %v251 = vmul.f32 %v246, %v249
      %v252 = vadd.f32 %v251, 4.930176e-32
      %v253 = vrsqrt.pop %v252
      %v254 = vmul.f32 %v250, %v253
      %v255 = vmax.f32 %v254, -1.0
      %v256 = vmin.f32 %v255, 1.0
      %v257 = vand.u32 2147483647, %v256
      %vm258 = vcmp.le.f32.partialorder %v257, 0.5
      %v259 = vsub.f32 1.0, %v257
      %v260 = vmul.f32 %v259, 0.5
      %v261 = vmax.f32 %v260, 0.0
      %v262 = vrsqrt.pop %v261
      %v263 = vmul.f32 %v261, %v262
      %vm264 = vcmp.eq.f32.partialorder %v261, inf
      %v265 = vsel %vm264, %v261, %v263
      %vm266 = vcmp.eq.f32.partialorder %v261, 0.0
      %v267 = vand.u32 %v261, 2147483648
      %v268 = vsel %vm266, %v267, %v265
      %v269 = vsel %vm258, %v257, %v268
      %v270 = vmul.f32 %v269, %v269
      %v271 = vmul.f32 %v270, 0.0421632
      %v272 = vadd.f32 %v271, 0.024181312
      %v273 = vmul.f32 %v272, %v270
      %v274 = vadd.f32 %v273, 0.045470025
      %v275 = vmul.f32 %v274, %v270
      %v276 = vadd.f32 %v275, 0.074953005
      %v277 = vmul.f32 %v276, %v270
      %v278 = vadd.f32 %v277, 0.16666752
      %v279 = vmul.f32 %v269, %v270
      %v280 = vmul.f32 %v279, %v278
      %v281 = vadd.f32 %v269, %v280
      %vm282 = vcmp.lt.f32.partialorder %v256, 0.0
      %v283 = vsub.f32 0.0, %v281
      %v284 = vsel %vm282, %v283, %v281
      %v285 = vsub.f32 1.5707964, %v284
      %v286 = vmul.f32 %v281, 2.0
      %v287 = vsub.f32 3.1415927, %v286
      %v288 = vsel %vm282, %v287, %v286
      %v289 = vsel %vm258, %v285, %v288
      %v290 = vmul.f32 %v289, 57.29578
      %v291 = vlaneseq
      %v292 = vand.u32 %v291, 127
      %v293 = vand.u32 %v292, 3
      %vm294 = vcmp.eq.s32.totalorder %v293, 0
      %s295 = smul.u32 %s17, 2
      %s296 = sadd.s32 %s295, %s18
      %p297 = scmp.lt.s32.totalorder %s296, 3
      // Predicated region
      $region33: #{loss_sam.1} parent=27 // pred_check
        %p298 = pneg %p297
      $region34: #{loss_sam.1} parent=27 // pred_check_branch
        %300 = sbr.rel (%p298) target = $region36
      $region35: #{loss_sam.1} parent=27 // pred_region
        %v301 = vsel %vm294, %v290, 0.0
        %v302 = vrot.slane %v301, 4
        %v303 = vadd.f32 %v301, %v302
        %v304 = vrot.slane %v303, 2
        %v305 = vadd.f32 %v303, %v304
        %v306 = vrot.slane %v305, 1
        %v307 = vadd.f32 %v305, %v306
        %v308 = vld [vmem:[%s221] sm:$0x1]
        %v309 = vadd.f32 %v308, %v307
        %310 = vst [vmem:[%s221] sm:$0x1] %v309
      $region36: #{loss_sam.1} parent=27 // pred_fallthru
        _
      %p311 = scmp.ge.s32.totalorder %s296, 3
      // Predicated region
      $region37: #{loss_sam.1} parent=27 // pred_check
        %p312 = pneg %p311
      $region38: #{loss_sam.1} parent=27 // pred_check_branch
        %314 = sbr.rel (%p312) target = $region40
      $region39: #{loss_sam.1} parent=27 // pred_region
        %v315 = vlaneseq
        %v316 = vshrl.u32 %v315, 7
        %s317 = smul.u32 %s296, 8
        %v318 = vstv %s317
        %v319 = vadd.s32 %v318, %v316
        %v320 = vmul.u32 %v319, 128
        %v321 = vadd.s32 %v320, %v292
        %vm322 = vcmp.lt.s32.totalorder %v321, 4096
        %vm323 = vmand %vm294, %vm322
        %v324 = vsel %vm323, %v290, 0.0
        %v325 = vrot.slane %v324, 4
        %v326 = vadd.f32 %v324, %v325
        %v327 = vrot.slane %v326, 2
        %v328 = vadd.f32 %v326, %v327
        %v329 = vrot.slane %v328, 1
        %v330 = vadd.f32 %v328, %v329
        %v331 = vld [vmem:[%s221] sm:$0x1]
        %v332 = vadd.f32 %v331, %v330
        %333 = vst [vmem:[%s221] sm:$0x1] %v332
      $region40: #{loss_sam.1} parent=27 // pred_fallthru
        _
      %p334 = scmp.lt.s32.totalorder %s17, 1
      %s335 = scalar_select %p334, %s17, 1
      %s336 = scalar_lea.vmem %s2, %s335
      // Predicated region
      $region41: #{loss_sam.1} parent=27 // pred_check
        %p337 = pneg %p111
      $region42: #{loss_sam.1} parent=27 // pred_check_branch
        %339 = sbr.rel (%p337) target = $region44
      $region43: #{loss_sam.1} parent=27 // pred_region
        _
      $region44: #{loss_sam.1} parent=27 // pred_fallthru
        _
    $region28: #{loss_sam.1} parent=5 // pred_fallthru
      _
    %p340 = scmp.le.s32.totalorder 2, %s8
    // Predicated region
    $region45: #{loss_sam.1} parent=5 // pred_check
      %p341 = pneg %p340
    $region46: #{loss_sam.1} parent=5 // pred_check_branch
      %343 = sbr.rel (%p341) target = $region48
    $region47: #{loss_sam.1} parent=5 // pred_region
      %s344 = ssub.s32 %s8, 2
      // Predicated region
      $region49: #{loss_sam.1} parent=47 // pred_check
        %p345 = pneg %p117
      $region50: #{loss_sam.1} parent=47 // pred_check_branch
        %347 = sbr.rel (%p345) target = $region52
      $region51: #{loss_sam.1} parent=47 // pred_region
        %p348 = scmp.lt.s32.totalorder %s19, 1
        %s349 = scalar_select %p348, %s19, 1
        %s350 = scalar_lea.vmem %s2, %s349
      $region52: #{loss_sam.1} parent=47 // pred_fallthru
        _
    $region48: #{loss_sam.1} parent=5 // pred_fallthru
      _
  $region6: #{loss_sam.1} parent=0 // loop_footer
    %s12 = sadd.s32 1, %s8
  $region7: #{loss_sam.1} parent=0 // loop_footer_branch
    %7 = sbr.rel target = $region3
  $region8: #{loss_sam.1} parent=0 // loop_exit
    _

</llo_original>
